<compile_context>
chip_gen: v7x
topology: tpu7x:2x2x1
jax: 0.10.0
libtpu: 0.0.40
codegen_flags: <defaults>
</compile_context>

<pallas_src>
import functools
import math

import jax
import jax.numpy as jnp
from jax.experimental import pallas as pl
from jax.experimental.pallas import tpu as pltpu


def commnet_kernel(state_ref, enc_w_ref, enc_b_ref, comm_w_ref, comm_b_ref,
                   head_w_ref, head_b_ref, pos_ref, sid_ref, out_ref, *,
                   comm_passes, n_agents, n_actions, lanes_per_agent):
    # One grid step processes TB batch rows; every row packs all N agents
    # side-by-side along lanes (agent-major, feature-minor flat layout).
    x = state_ref[...]                                            # (TB, N*obs)

    # encoder + tanh (forward_state_encoder, non-recurrent branch).
    # enc_w == kron(I_N, enc_w.T): agents stay independent.
    encoded = jnp.tanh(
        jnp.dot(x, enc_w_ref[...], preferred_element_type=jnp.float32)
        + enc_b_ref[...])                                         # (TB, N*hid)
    hidden = encoded

    # Each comm pass is ONE fused matmul: kron(I + comm_mask, Wc^T) performs
    # the cross-agent aggregation (identity folded in) and the C module for
    # all agents at once.  Bias carries the fused 2*c_b.
    for i in range(comm_passes):                                  # unrolled
        hidden = jnp.tanh(
            encoded
            + jnp.dot(hidden, comm_w_ref[i],
                      preferred_element_type=jnp.float32)
            + comm_b_ref[i])                                      # (TB, N*hid)

    # Fused action + value head: kron(I_N, [act | val | pad]).  Per-agent
    # segment of LA lanes = [A logits | value | zero pad].
    head = (jnp.dot(hidden, head_w_ref[...],
                    preferred_element_type=jnp.float32)
            + head_b_ref[...])                                    # (TB, N*LA)

    A = n_actions
    LA = lanes_per_agent
    pos = pos_ref[...]                                            # (1, N*LA) lane % LA
    sid = sid_ref[...]                                            # (1, N*LA) lane // LA
    neg = jnp.float32(-1e30)

    is_logit = pos < A                                            # (1, N*LA)
    masked = jnp.where(is_logit, head, neg)                       # (TB, N*LA)

    # Per-agent (segmented) softmax using only full-width ops: N masked
    # row-reductions + broadcasts -- no lane slicing, no reshapes.
    m_full = jnp.full_like(head, neg)
    for k in range(n_agents):                                     # unrolled; N small
        in_seg = sid == k                                         # (1, N*LA)
        m_k = jnp.max(jnp.where(in_seg, masked, neg),
                      axis=-1, keepdims=True)                     # (TB, 1)
        m_full = jnp.where(in_seg, m_k, m_full)

    e = jnp.exp(masked - m_full)                                  # 0 on value/pad lanes

    s_full = jnp.zeros_like(head)
    for k in range(n_agents):
        in_seg = sid == k
        s_k = jnp.sum(jnp.where(in_seg, e, 0.0),
                      axis=-1, keepdims=True)                     # (TB, 1)
        s_full = jnp.where(in_seg, s_k, s_full)

    r = pl.reciprocal(s_full, approx=True)                        # EUP slot
    r = r * (2.0 - s_full * r)                                    # Newton -> ~exact
    probs = e * r                                                 # zeros outside logits

    # Packed lane-dense store: per agent [softmax probs | value | zeros].
    out_ref[...] = jnp.where(pos == A, head, probs)


def _pick_tb(batch, target=1024):
    """Batch rows per grid step: prefer 8-aligned divisors of `batch` that
    give >= 2 grid steps (v7x megacore sharding + input/output pipelining);
    fall back to the whole batch for tiny inputs."""
    hi = min(batch, target)
    for tb in range(hi, 0, -1):
        if batch % tb == 0 and tb % 8 == 0 and batch // tb >= 2:
            return tb
    for tb in range(hi, 0, -1):
        if batch % tb == 0 and (tb % 8 == 0 or tb == batch):
            return tb
    return batch


def commnet_pallas(state, params, comm_mask, comm_passes):
    B, N, obs = state.shape
    hid = params['enc_w'].shape[0]
    A = params['act_w'].shape[0]
    P = comm_passes
    f32 = jnp.float32

    # Per-agent output lane width: smallest width holding A logits + value
    # such that N*LA is a multiple of 128 (lane-dense, unmasked stores).
    step = 128 // math.gcd(N, 128)
    LA = ((A + 1 + step - 1) // step) * step
    W_OUT = N * LA

    TB = _pick_tb(B)
    grid = (B // TB,)

    # ---- wrapper-side weight prep (XLA constant-folds these) ----
    eyeN = jnp.eye(N, dtype=f32)
    state_flat = state.reshape(B, N * obs).astype(f32)            # (B, N*obs)

    enc_w = jnp.kron(eyeN, params['enc_w'].T.astype(f32))          # (N*obs, N*hid)
    enc_b = jnp.tile(params['enc_b'].astype(f32), N).reshape(1, N * hid)

    # Fused per-pass weight: comm aggregation (+ identity) and C module.
    m_plus = eyeN + comm_mask.astype(f32)                          # I + comm_mask
    comm_w = jnp.stack([jnp.kron(m_plus, params['c_w'][i].T.astype(f32))
                        for i in range(P)])                        # (P, N*hid, N*hid)
    comm_b = jnp.tile(2.0 * params['c_b'].astype(f32),
                      (1, N)).reshape(P, 1, N * hid)               # fused 2*bias

    head_pad = jnp.zeros((hid, LA), f32)
    head_pad = head_pad.at[:, :A].set(params['act_w'].T.astype(f32))
    head_pad = head_pad.at[:, A].set(params['val_w'][0].astype(f32))
    head_w = jnp.kron(eyeN, head_pad)                              # (N*hid, N*LA)
    hb = jnp.zeros((LA,), f32)
    hb = hb.at[:A].set(params['act_b'].astype(f32))
    hb = hb.at[A].set(params['val_b'][0].astype(f32))
    head_b = jnp.tile(hb, N).reshape(1, W_OUT)

    # Lane bookkeeping rows for the segmented softmax (position within agent
    # segment, and agent/segment id) -- tiny replicated int32 inputs.
    lane_idx = jnp.arange(W_OUT, dtype=jnp.int32)
    seg_pos = (lane_idx % LA).reshape(1, W_OUT)
    seg_id = (lane_idx // LA).reshape(1, W_OUT)

    def rep(a):
        # Grid-invariant operand: single-buffered (double-buffering it would
        # only double its VMEM footprint with zero pipelining benefit).
        nd = a.ndim
        return pl.BlockSpec(a.shape, lambda b, _nd=nd: (0,) * _nd,
                            pipeline_mode=pl.Buffered(1))

    weight_bytes = sum(int(w.size) * w.dtype.itemsize for w in
                       (enc_w, enc_b, comm_w, comm_b, head_w, head_b,
                        seg_pos, seg_id))
    io_bytes = 2 * 2 * TB * (N * obs + W_OUT) * 4                  # dbl-buffered I/O
    act_bytes = 6 * TB * max(N * hid, W_OUT, N * obs) * 4          # live temporaries
    vmem_limit = int(min(max(weight_bytes + io_bytes + act_bytes + (4 << 20),
                             16 << 20), 64 << 20))

    kernel = functools.partial(commnet_kernel, comm_passes=P, n_agents=N,
                               n_actions=A, lanes_per_agent=LA)

    slab = pl.pallas_call(
        kernel,
        out_shape=jax.ShapeDtypeStruct((B, W_OUT), f32),
        grid=grid,
        in_specs=[
            pl.BlockSpec((TB, N * obs), lambda b: (b, 0)),         # state rows
            rep(enc_w), rep(enc_b), rep(comm_w), rep(comm_b),
            rep(head_w), rep(head_b), rep(seg_pos), rep(seg_id),
        ],
        out_specs=pl.BlockSpec((TB, W_OUT), lambda b: (b, 0)),     # packed slab
        compiler_params=pltpu.CompilerParams(
            dimension_semantics=("parallel",),                     # v7x megacore
            vmem_limit_bytes=vmem_limit),
    )(state_flat, enc_w, enc_b, comm_w, comm_b, head_w, head_b, seg_pos, seg_id)

    slab3 = slab.reshape(B, N, LA)
    probs = slab3[:, :, :A]
    value = slab3[:, :, A:A + 1]
    return probs, value


def ref_forward(state, params, comm_mask, comm_passes):
    """Plain-JAX reference mirroring the PyTorch forward (non-recurrent)."""
    enc = jnp.tanh(state @ params['enc_w'].T + params['enc_b'])
    hidden = enc
    for i in range(comm_passes):
        comm_sum = jnp.einsum('jk,bjh->bkh', comm_mask, hidden)
        c = comm_sum @ params['c_w'][i].T + params['c_b'][i]
        h_lin = hidden @ params['c_w'][i].T + params['c_b'][i]
        hidden = jnp.tanh(enc + h_lin + c)
    value = hidden @ params['val_w'].T + params['val_b']
    logits = hidden @ params['act_w'].T + params['act_b']
    probs = jax.nn.softmax(logits, axis=-1)
    return probs, value


if __name__ == "__main__":
    B, N_AGENTS, OBS, HID, N_ACTIONS, COMM_PASSES = 2, 4, 16, 32, 8, 2

    key = jax.random.PRNGKey(0)
    keys = jax.random.split(key, 10)
    init_std = 0.2
    params = {
        'enc_w': init_std * jax.random.normal(keys[0], (HID, OBS), jnp.float32),
        'enc_b': init_std * jax.random.normal(keys[1], (HID,), jnp.float32),
        'c_w': init_std * jax.random.normal(keys[2], (COMM_PASSES, HID, HID),
                                            jnp.float32),
        'c_b': init_std * jax.random.normal(keys[3], (COMM_PASSES, HID),
                                            jnp.float32),
        'act_w': init_std * jax.random.normal(keys[4], (N_ACTIONS, HID),
                                              jnp.float32),
        'act_b': init_std * jax.random.normal(keys[5], (N_ACTIONS,),
                                              jnp.float32),
        'val_w': init_std * jax.random.normal(keys[6], (1, HID), jnp.float32),
        'val_b': init_std * jax.random.normal(keys[7], (1,), jnp.float32),
    }
    state = jax.random.normal(keys[8], (B, N_AGENTS, OBS), jnp.float32)

    # args.comm == False  ->  comm_mask = ones - eye
    comm_mask = (jnp.ones((N_AGENTS, N_AGENTS), jnp.float32)
                 - jnp.eye(N_AGENTS, dtype=jnp.float32))

    probs, value = commnet_pallas(state, params, comm_mask, COMM_PASSES)
    jax.block_until_ready((probs, value))

    ref_probs, ref_value = ref_forward(state, params, comm_mask, COMM_PASSES)
    assert probs.shape == (B, N_AGENTS, N_ACTIONS)
    assert value.shape == (B, N_AGENTS, 1)
    # Fused kron matmuls / approx-recip+Newton reorder float ops slightly;
    # keep a modest but meaningful tolerance.
    assert jnp.allclose(probs, ref_probs, atol=1e-4, rtol=1e-4), "probs mismatch"
    assert jnp.allclose(value, ref_value, atol=1e-4, rtol=1e-4), "value mismatch"
    assert jnp.allclose(jnp.sum(probs, axis=-1), 1.0, atol=1e-4)

    # Also exercise a non-trivial (general) comm mask through the same
    # fused-kron path.
    rand_mask = jax.random.uniform(keys[9], (N_AGENTS, N_AGENTS),
                                   jnp.float32, 0.0, 1.0)
    probs2, value2 = commnet_pallas(state, params, rand_mask, COMM_PASSES)
    jax.block_until_ready((probs2, value2))
    ref_probs2, ref_value2 = ref_forward(state, params, rand_mask, COMM_PASSES)
    assert jnp.allclose(probs2, ref_probs2, atol=1e-4, rtol=1e-4), "probs2 mismatch"
    assert jnp.allclose(value2, ref_value2, atol=1e-4, rtol=1e-4), "value2 mismatch"

    print("KERNEL_OK")
</pallas_src>

<mosaic_0001>
module attributes {stable_mosaic.version = 11 : i64} {
  func.func @commnet_kernel(%arg0: i32, %arg1: memref<2x64xf32, #tpu.memory_space<vmem>>, %arg2: memref<64x128xf32, #tpu.memory_space<vmem>>, %arg3: memref<1x128xf32, #tpu.memory_space<vmem>>, %arg4: memref<2x128x128xf32, #tpu.memory_space<vmem>>, %arg5: memref<2x1x128xf32, #tpu.memory_space<vmem>>, %arg6: memref<128x128xf32, #tpu.memory_space<vmem>>, %arg7: memref<1x128xf32, #tpu.memory_space<vmem>>, %arg8: memref<1x128xi32, #tpu.memory_space<vmem>>, %arg9: memref<1x128xi32, #tpu.memory_space<vmem>>, %arg10: memref<2x128xf32, #tpu.memory_space<vmem>>) attributes {dimension_semantics = [#tpu.dimension_semantics<parallel>], iteration_bounds = array<i64: 1>, scalar_prefetch = 0 : i64, scratch_operands = 0 : i64, tpu.core_type = #tpu.core_type<tc>, window_params = [{transform_indices = @transform_0, window_bounds = array<i64: 2, 64>}, {pipeline_mode = #tpu.pipeline_mode<synchronous>, transform_indices = @transform_1, window_bounds = array<i64: 64, 128>}, {pipeline_mode = #tpu.pipeline_mode<synchronous>, transform_indices = @transform_2, window_bounds = array<i64: 1, 128>}, {pipeline_mode = #tpu.pipeline_mode<synchronous>, transform_indices = @transform_3, window_bounds = array<i64: 2, 128, 128>}, {pipeline_mode = #tpu.pipeline_mode<synchronous>, transform_indices = @transform_4, window_bounds = array<i64: 2, 1, 128>}, {pipeline_mode = #tpu.pipeline_mode<synchronous>, transform_indices = @transform_5, window_bounds = array<i64: 128, 128>}, {pipeline_mode = #tpu.pipeline_mode<synchronous>, transform_indices = @transform_6, window_bounds = array<i64: 1, 128>}, {pipeline_mode = #tpu.pipeline_mode<synchronous>, transform_indices = @transform_7, window_bounds = array<i64: 1, 128>}, {pipeline_mode = #tpu.pipeline_mode<synchronous>, transform_indices = @transform_8, window_bounds = array<i64: 1, 128>}, {transform_indices = @transform_9, window_bounds = array<i64: 2, 128>}]} {
    %c0 = arith.constant 0 : index
    %c0_0 = arith.constant 0 : index
    %0 = vector.load %arg1[%c0, %c0_0] : memref<2x64xf32, #tpu.memory_space<vmem>>, vector<2x64xf32>
    %c0_1 = arith.constant 0 : index
    %c0_2 = arith.constant 0 : index
    %1 = vector.load %arg2[%c0_1, %c0_2] : memref<64x128xf32, #tpu.memory_space<vmem>>, vector<64x128xf32>
    %cst = arith.constant dense<0.000000e+00> : vector<2x128xf32>
    %2 = tpu.matmul %0, %1, %cst {dimension_numbers = #tpu.dot_dimension_numbers<[1], [0], [0], [1], [0, 0, 1, 1], [], []>} : vector<2x64xf32>, vector<64x128xf32>, vector<2x128xf32> -> vector<2x128xf32>
    %c0_3 = arith.constant 0 : index
    %c0_4 = arith.constant 0 : index
    %3 = vector.load %arg3[%c0_3, %c0_4] : memref<1x128xf32, #tpu.memory_space<vmem>>, vector<1x128xf32>
    %4 = vector.broadcast %3 : vector<1x128xf32> to vector<2x128xf32>
    %5 = arith.addf %2, %4 : vector<2x128xf32>
    %6 = math.tanh %5 : vector<2x128xf32>
    %c0_5 = arith.constant 0 : index
    %c0_6 = arith.constant 0 : index
    %c0_7 = arith.constant 0 : index
    %7 = vector.load %arg4[%c0_5, %c0_6, %c0_7] : memref<2x128x128xf32, #tpu.memory_space<vmem>>, vector<1x128x128xf32>
    %8 = vector.shape_cast %7 : vector<1x128x128xf32> to vector<128x128xf32>
    %cst_8 = arith.constant dense<0.000000e+00> : vector<2x128xf32>
    %9 = tpu.matmul %6, %8, %cst_8 {dimension_numbers = #tpu.dot_dimension_numbers<[1], [0], [0], [1], [0, 0, 1, 1], [], []>} : vector<2x128xf32>, vector<128x128xf32>, vector<2x128xf32> -> vector<2x128xf32>
    %10 = arith.addf %6, %9 : vector<2x128xf32>
    %c0_9 = arith.constant 0 : index
    %c0_10 = arith.constant 0 : index
    %c0_11 = arith.constant 0 : index
    %11 = vector.load %arg5[%c0_9, %c0_10, %c0_11] : memref<2x1x128xf32, #tpu.memory_space<vmem>>, vector<1x1x128xf32>
    %12 = vector.shape_cast %11 : vector<1x1x128xf32> to vector<1x128xf32>
    %13 = vector.broadcast %12 : vector<1x128xf32> to vector<2x128xf32>
    %14 = arith.addf %10, %13 : vector<2x128xf32>
    %15 = math.tanh %14 : vector<2x128xf32>
    %c1 = arith.constant 1 : index
    %c0_12 = arith.constant 0 : index
    %c0_13 = arith.constant 0 : index
    %16 = vector.load %arg4[%c1, %c0_12, %c0_13] : memref<2x128x128xf32, #tpu.memory_space<vmem>>, vector<1x128x128xf32>
    %17 = vector.shape_cast %16 : vector<1x128x128xf32> to vector<128x128xf32>
    %cst_14 = arith.constant dense<0.000000e+00> : vector<2x128xf32>
    %18 = tpu.matmul %15, %17, %cst_14 {dimension_numbers = #tpu.dot_dimension_numbers<[1], [0], [0], [1], [0, 0, 1, 1], [], []>} : vector<2x128xf32>, vector<128x128xf32>, vector<2x128xf32> -> vector<2x128xf32>
    %19 = arith.addf %6, %18 : vector<2x128xf32>
    %c1_15 = arith.constant 1 : index
    %c0_16 = arith.constant 0 : index
    %c0_17 = arith.constant 0 : index
    %20 = vector.load %arg5[%c1_15, %c0_16, %c0_17] : memref<2x1x128xf32, #tpu.memory_space<vmem>>, vector<1x1x128xf32>
    %21 = vector.shape_cast %20 : vector<1x1x128xf32> to vector<1x128xf32>
    %22 = vector.broadcast %21 : vector<1x128xf32> to vector<2x128xf32>
    %23 = arith.addf %19, %22 : vector<2x128xf32>
    %24 = math.tanh %23 : vector<2x128xf32>
    %c0_18 = arith.constant 0 : index
    %c0_19 = arith.constant 0 : index
    %25 = vector.load %arg6[%c0_18, %c0_19] : memref<128x128xf32, #tpu.memory_space<vmem>>, vector<128x128xf32>
    %cst_20 = arith.constant dense<0.000000e+00> : vector<2x128xf32>
    %26 = tpu.matmul %24, %25, %cst_20 {dimension_numbers = #tpu.dot_dimension_numbers<[1], [0], [0], [1], [0, 0, 1, 1], [], []>} : vector<2x128xf32>, vector<128x128xf32>, vector<2x128xf32> -> vector<2x128xf32>
    %c0_21 = arith.constant 0 : index
    %c0_22 = arith.constant 0 : index
    %27 = vector.load %arg7[%c0_21, %c0_22] : memref<1x128xf32, #tpu.memory_space<vmem>>, vector<1x128xf32>
    %28 = vector.broadcast %27 : vector<1x128xf32> to vector<2x128xf32>
    %29 = arith.addf %26, %28 : vector<2x128xf32>
    %c0_23 = arith.constant 0 : index
    %c0_24 = arith.constant 0 : index
    %30 = vector.load %arg8[%c0_23, %c0_24] : memref<1x128xi32, #tpu.memory_space<vmem>>, vector<1x128xi32>
    %c0_25 = arith.constant 0 : index
    %c0_26 = arith.constant 0 : index
    %31 = vector.load %arg9[%c0_25, %c0_26] : memref<1x128xi32, #tpu.memory_space<vmem>>, vector<1x128xi32>
    %c8_i32 = arith.constant 8 : i32
    %32 = vector.broadcast %c8_i32 : i32 to vector<1x128xi32>
    %33 = arith.cmpi slt, %30, %32 : vector<1x128xi32>
    %cst_27 = arith.constant -1.000000e+30 : f32
    %34 = vector.shape_cast %33 : vector<1x128xi1> to vector<1x128xi1>
    %35 = vector.broadcast %34 : vector<1x128xi1> to vector<2x128xi1>
    %36 = vector.broadcast %cst_27 : f32 to vector<2x128xf32>
    %37 = arith.select %35, %29, %36 : vector<2x128xi1>, vector<2x128xf32>
    %cst_28 = arith.constant -1.000000e+30 : f32
    %38 = vector.broadcast %cst_28 : f32 to vector<2x128xf32>
    %c0_i32 = arith.constant 0 : i32
    %39 = vector.broadcast %c0_i32 : i32 to vector<1x128xi32>
    %40 = arith.cmpi eq, %31, %39 : vector<1x128xi32>
    %cst_29 = arith.constant -1.000000e+30 : f32
    %41 = vector.shape_cast %40 : vector<1x128xi1> to vector<1x128xi1>
    %42 = vector.broadcast %41 : vector<1x128xi1> to vector<2x128xi1>
    %43 = vector.broadcast %cst_29 : f32 to vector<2x128xf32>
    %44 = arith.select %42, %37, %43 : vector<2x128xi1>, vector<2x128xf32>
    %cst_30 = arith.constant dense<0xFF800000> : vector<2xf32>
    %45 = vector.multi_reduction <maximumf>, %44, %cst_30 [1] : vector<2x128xf32> to vector<2xf32>
    %46 = vector.shape_cast %45 : vector<2xf32> to vector<2x1xf32>
    %47 = vector.shape_cast %40 : vector<1x128xi1> to vector<1x128xi1>
    %48 = vector.broadcast %47 : vector<1x128xi1> to vector<2x128xi1>
    %49 = vector.shape_cast %46 : vector<2x1xf32> to vector<2x1xf32>
    %50 = vector.broadcast %49 : vector<2x1xf32> to vector<2x128xf32>
    %51 = arith.select %48, %50, %38 : vector<2x128xi1>, vector<2x128xf32>
    %c1_i32 = arith.constant 1 : i32
    %52 = vector.broadcast %c1_i32 : i32 to vector<1x128xi32>
    %53 = arith.cmpi eq, %31, %52 : vector<1x128xi32>
    %cst_31 = arith.constant -1.000000e+30 : f32
    %54 = vector.shape_cast %53 : vector<1x128xi1> to vector<1x128xi1>
    %55 = vector.broadcast %54 : vector<1x128xi1> to vector<2x128xi1>
    %56 = vector.broadcast %cst_31 : f32 to vector<2x128xf32>
    %57 = arith.select %55, %37, %56 : vector<2x128xi1>, vector<2x128xf32>
    %cst_32 = arith.constant dense<0xFF800000> : vector<2xf32>
    %58 = vector.multi_reduction <maximumf>, %57, %cst_32 [1] : vector<2x128xf32> to vector<2xf32>
    %59 = vector.shape_cast %58 : vector<2xf32> to vector<2x1xf32>
    %60 = vector.shape_cast %53 : vector<1x128xi1> to vector<1x128xi1>
    %61 = vector.broadcast %60 : vector<1x128xi1> to vector<2x128xi1>
    %62 = vector.shape_cast %59 : vector<2x1xf32> to vector<2x1xf32>
    %63 = vector.broadcast %62 : vector<2x1xf32> to vector<2x128xf32>
    %64 = arith.select %61, %63, %51 : vector<2x128xi1>, vector<2x128xf32>
    %c2_i32 = arith.constant 2 : i32
    %65 = vector.broadcast %c2_i32 : i32 to vector<1x128xi32>
    %66 = arith.cmpi eq, %31, %65 : vector<1x128xi32>
    %cst_33 = arith.constant -1.000000e+30 : f32
    %67 = vector.shape_cast %66 : vector<1x128xi1> to vector<1x128xi1>
    %68 = vector.broadcast %67 : vector<1x128xi1> to vector<2x128xi1>
    %69 = vector.broadcast %cst_33 : f32 to vector<2x128xf32>
    %70 = arith.select %68, %37, %69 : vector<2x128xi1>, vector<2x128xf32>
    %cst_34 = arith.constant dense<0xFF800000> : vector<2xf32>
    %71 = vector.multi_reduction <maximumf>, %70, %cst_34 [1] : vector<2x128xf32> to vector<2xf32>
    %72 = vector.shape_cast %71 : vector<2xf32> to vector<2x1xf32>
    %73 = vector.shape_cast %66 : vector<1x128xi1> to vector<1x128xi1>
    %74 = vector.broadcast %73 : vector<1x128xi1> to vector<2x128xi1>
    %75 = vector.shape_cast %72 : vector<2x1xf32> to vector<2x1xf32>
    %76 = vector.broadcast %75 : vector<2x1xf32> to vector<2x128xf32>
    %77 = arith.select %74, %76, %64 : vector<2x128xi1>, vector<2x128xf32>
    %c3_i32 = arith.constant 3 : i32
    %78 = vector.broadcast %c3_i32 : i32 to vector<1x128xi32>
    %79 = arith.cmpi eq, %31, %78 : vector<1x128xi32>
    %cst_35 = arith.constant -1.000000e+30 : f32
    %80 = vector.shape_cast %79 : vector<1x128xi1> to vector<1x128xi1>
    %81 = vector.broadcast %80 : vector<1x128xi1> to vector<2x128xi1>
    %82 = vector.broadcast %cst_35 : f32 to vector<2x128xf32>
    %83 = arith.select %81, %37, %82 : vector<2x128xi1>, vector<2x128xf32>
    %cst_36 = arith.constant dense<0xFF800000> : vector<2xf32>
    %84 = vector.multi_reduction <maximumf>, %83, %cst_36 [1] : vector<2x128xf32> to vector<2xf32>
    %85 = vector.shape_cast %84 : vector<2xf32> to vector<2x1xf32>
    %86 = vector.shape_cast %79 : vector<1x128xi1> to vector<1x128xi1>
    %87 = vector.broadcast %86 : vector<1x128xi1> to vector<2x128xi1>
    %88 = vector.shape_cast %85 : vector<2x1xf32> to vector<2x1xf32>
    %89 = vector.broadcast %88 : vector<2x1xf32> to vector<2x128xf32>
    %90 = arith.select %87, %89, %77 : vector<2x128xi1>, vector<2x128xf32>
    %91 = arith.subf %37, %90 : vector<2x128xf32>
    %92 = math.exp %91 : vector<2x128xf32>
    %cst_37 = arith.constant 0.000000e+00 : f32
    %93 = vector.broadcast %cst_37 : f32 to vector<2x128xf32>
    %c0_i32_38 = arith.constant 0 : i32
    %94 = vector.broadcast %c0_i32_38 : i32 to vector<1x128xi32>
    %95 = arith.cmpi eq, %31, %94 : vector<1x128xi32>
    %cst_39 = arith.constant 0.000000e+00 : f32
    %96 = vector.shape_cast %95 : vector<1x128xi1> to vector<1x128xi1>
    %97 = vector.broadcast %96 : vector<1x128xi1> to vector<2x128xi1>
    %98 = vector.broadcast %cst_39 : f32 to vector<2x128xf32>
    %99 = arith.select %97, %92, %98 : vector<2x128xi1>, vector<2x128xf32>
    %cst_40 = arith.constant dense<0.000000e+00> : vector<2xf32>
    %100 = vector.multi_reduction <add>, %99, %cst_40 [1] : vector<2x128xf32> to vector<2xf32>
    %101 = vector.shape_cast %100 : vector<2xf32> to vector<2x1xf32>
    %102 = vector.shape_cast %95 : vector<1x128xi1> to vector<1x128xi1>
    %103 = vector.broadcast %102 : vector<1x128xi1> to vector<2x128xi1>
    %104 = vector.shape_cast %101 : vector<2x1xf32> to vector<2x1xf32>
    %105 = vector.broadcast %104 : vector<2x1xf32> to vector<2x128xf32>
    %106 = arith.select %103, %105, %93 : vector<2x128xi1>, vector<2x128xf32>
    %c1_i32_41 = arith.constant 1 : i32
    %107 = vector.broadcast %c1_i32_41 : i32 to vector<1x128xi32>
    %108 = arith.cmpi eq, %31, %107 : vector<1x128xi32>
    %cst_42 = arith.constant 0.000000e+00 : f32
    %109 = vector.shape_cast %108 : vector<1x128xi1> to vector<1x128xi1>
    %110 = vector.broadcast %109 : vector<1x128xi1> to vector<2x128xi1>
    %111 = vector.broadcast %cst_42 : f32 to vector<2x128xf32>
    %112 = arith.select %110, %92, %111 : vector<2x128xi1>, vector<2x128xf32>
    %cst_43 = arith.constant dense<0.000000e+00> : vector<2xf32>
    %113 = vector.multi_reduction <add>, %112, %cst_43 [1] : vector<2x128xf32> to vector<2xf32>
    %114 = vector.shape_cast %113 : vector<2xf32> to vector<2x1xf32>
    %115 = vector.shape_cast %108 : vector<1x128xi1> to vector<1x128xi1>
    %116 = vector.broadcast %115 : vector<1x128xi1> to vector<2x128xi1>
    %117 = vector.shape_cast %114 : vector<2x1xf32> to vector<2x1xf32>
    %118 = vector.broadcast %117 : vector<2x1xf32> to vector<2x128xf32>
    %119 = arith.select %116, %118, %106 : vector<2x128xi1>, vector<2x128xf32>
    %c2_i32_44 = arith.constant 2 : i32
    %120 = vector.broadcast %c2_i32_44 : i32 to vector<1x128xi32>
    %121 = arith.cmpi eq, %31, %120 : vector<1x128xi32>
    %cst_45 = arith.constant 0.000000e+00 : f32
    %122 = vector.shape_cast %121 : vector<1x128xi1> to vector<1x128xi1>
    %123 = vector.broadcast %122 : vector<1x128xi1> to vector<2x128xi1>
    %124 = vector.broadcast %cst_45 : f32 to vector<2x128xf32>
    %125 = arith.select %123, %92, %124 : vector<2x128xi1>, vector<2x128xf32>
    %cst_46 = arith.constant dense<0.000000e+00> : vector<2xf32>
    %126 = vector.multi_reduction <add>, %125, %cst_46 [1] : vector<2x128xf32> to vector<2xf32>
    %127 = vector.shape_cast %126 : vector<2xf32> to vector<2x1xf32>
    %128 = vector.shape_cast %121 : vector<1x128xi1> to vector<1x128xi1>
    %129 = vector.broadcast %128 : vector<1x128xi1> to vector<2x128xi1>
    %130 = vector.shape_cast %127 : vector<2x1xf32> to vector<2x1xf32>
    %131 = vector.broadcast %130 : vector<2x1xf32> to vector<2x128xf32>
    %132 = arith.select %129, %131, %119 : vector<2x128xi1>, vector<2x128xf32>
    %c3_i32_47 = arith.constant 3 : i32
    %133 = vector.broadcast %c3_i32_47 : i32 to vector<1x128xi32>
    %134 = arith.cmpi eq, %31, %133 : vector<1x128xi32>
    %cst_48 = arith.constant 0.000000e+00 : f32
    %135 = vector.shape_cast %134 : vector<1x128xi1> to vector<1x128xi1>
    %136 = vector.broadcast %135 : vector<1x128xi1> to vector<2x128xi1>
    %137 = vector.broadcast %cst_48 : f32 to vector<2x128xf32>
    %138 = arith.select %136, %92, %137 : vector<2x128xi1>, vector<2x128xf32>
    %cst_49 = arith.constant dense<0.000000e+00> : vector<2xf32>
    %139 = vector.multi_reduction <add>, %138, %cst_49 [1] : vector<2x128xf32> to vector<2xf32>
    %140 = vector.shape_cast %139 : vector<2xf32> to vector<2x1xf32>
    %141 = vector.shape_cast %134 : vector<1x128xi1> to vector<1x128xi1>
    %142 = vector.broadcast %141 : vector<1x128xi1> to vector<2x128xi1>
    %143 = vector.shape_cast %140 : vector<2x1xf32> to vector<2x1xf32>
    %144 = vector.broadcast %143 : vector<2x1xf32> to vector<2x128xf32>
    %145 = arith.select %142, %144, %132 : vector<2x128xi1>, vector<2x128xf32>
    %146 = tpu.reciprocal %145 {approx = true} : vector<2x128xf32> -> vector<2x128xf32>
    %147 = arith.mulf %145, %146 : vector<2x128xf32>
    %cst_50 = arith.constant 2.000000e+00 : f32
    %148 = vector.broadcast %cst_50 : f32 to vector<2x128xf32>
    %149 = arith.subf %148, %147 : vector<2x128xf32>
    %150 = arith.mulf %146, %149 : vector<2x128xf32>
    %151 = arith.mulf %92, %150 : vector<2x128xf32>
    %c8_i32_51 = arith.constant 8 : i32
    %152 = vector.broadcast %c8_i32_51 : i32 to vector<1x128xi32>
    %153 = arith.cmpi eq, %30, %152 : vector<1x128xi32>
    %154 = vector.shape_cast %153 : vector<1x128xi1> to vector<1x128xi1>
    %155 = vector.broadcast %154 : vector<1x128xi1> to vector<2x128xi1>
    %156 = arith.select %155, %29, %151 : vector<2x128xi1>, vector<2x128xf32>
    %c0_52 = arith.constant 0 : index
    %c0_53 = arith.constant 0 : index
    %157 = vector.load %arg10[%c0_52, %c0_53] : memref<2x128xf32, #tpu.memory_space<vmem>>, vector<2x128xf32>
    tpu.vector_store %arg10[%c0_52, %c0_53], %156 {strides = array<i32>} : memref<2x128xf32, #tpu.memory_space<vmem>>, vector<2x128xf32>,
    return
  }
  func.func @transform_0(%arg0: i32) -> (i32, i32) {
    %c0_i32 = arith.constant 0 : i32
    %c0_i32_0 = arith.constant 0 : i32
    return %arg0, %c0_i32 : i32, i32
  }
  func.func @transform_1(%arg0: i32) -> (i32, i32) {
    %c0_i32 = arith.constant 0 : i32
    %c0_i32_0 = arith.constant 0 : i32
    %c0_i32_1 = arith.constant 0 : i32
    return %c0_i32, %c0_i32_0 : i32, i32
  }
  func.func @transform_2(%arg0: i32) -> (i32, i32) {
    %c0_i32 = arith.constant 0 : i32
    %c0_i32_0 = arith.constant 0 : i32
    %c0_i32_1 = arith.constant 0 : i32
    return %c0_i32, %c0_i32_0 : i32, i32
  }
  func.func @transform_3(%arg0: i32) -> (i32, i32, i32) {
    %c0_i32 = arith.constant 0 : i32
    %c0_i32_0 = arith.constant 0 : i32
    %c0_i32_1 = arith.constant 0 : i32
    %c0_i32_2 = arith.constant 0 : i32
    return %c0_i32, %c0_i32_0, %c0_i32_1 : i32, i32, i32
  }
  func.func @transform_4(%arg0: i32) -> (i32, i32, i32) {
    %c0_i32 = arith.constant 0 : i32
    %c0_i32_0 = arith.constant 0 : i32
    %c0_i32_1 = arith.constant 0 : i32
    %c0_i32_2 = arith.constant 0 : i32
    return %c0_i32, %c0_i32_0, %c0_i32_1 : i32, i32, i32
  }
  func.func @transform_5(%arg0: i32) -> (i32, i32) {
    %c0_i32 = arith.constant 0 : i32
    %c0_i32_0 = arith.constant 0 : i32
    %c0_i32_1 = arith.constant 0 : i32
    return %c0_i32, %c0_i32_0 : i32, i32
  }
  func.func @transform_6(%arg0: i32) -> (i32, i32) {
    %c0_i32 = arith.constant 0 : i32
    %c0_i32_0 = arith.constant 0 : i32
    %c0_i32_1 = arith.constant 0 : i32
    return %c0_i32, %c0_i32_0 : i32, i32
  }
  func.func @transform_7(%arg0: i32) -> (i32, i32) {
    %c0_i32 = arith.constant 0 : i32
    %c0_i32_0 = arith.constant 0 : i32
    %c0_i32_1 = arith.constant 0 : i32
    return %c0_i32, %c0_i32_0 : i32, i32
  }
  func.func @transform_8(%arg0: i32) -> (i32, i32) {
    %c0_i32 = arith.constant 0 : i32
    %c0_i32_0 = arith.constant 0 : i32
    %c0_i32_1 = arith.constant 0 : i32
    return %c0_i32, %c0_i32_0 : i32, i32
  }
  func.func @transform_9(%arg0: i32) -> (i32, i32) {
    %c0_i32 = arith.constant 0 : i32
    %c0_i32_0 = arith.constant 0 : i32
    return %arg0, %c0_i32 : i32, i32
  }
}

</mosaic_0001>

<llo_original>
// kernel: tpu_custom_call.1
$region0: #{tpu_custom_call.1}
  #allocation0 [shape = 'u32[]', space=smem, size = 0x4, offset = 0x4, fixed_abs, tag = 'smem constant byte address 0x4 - core index']
  #allocation1 [shape = 'u32[144,128]{1,0:T(1,128)}', space=vmem, size = 0x12000, scoped, tag = 'internal scratch']
  %s0 = inlined_call_operand.hbm [shape: f32[2,64], index: 0, kind: input, shape index: {}]
  %s1 = inlined_call_operand.hbm [shape: f32[64,128], index: 1, kind: input, shape index: {}]
  %s2 = inlined_call_operand.vmem [shape: f32[1,128], index: 2, kind: input, shape index: {}]
  %s3 = inlined_call_operand.hbm [shape: f32[2,128,128], index: 3, kind: input, shape index: {}]
  %s4 = inlined_call_operand.vmem [shape: f32[2,1,128], index: 4, kind: input, shape index: {}]
  %s5 = inlined_call_operand.hbm [shape: f32[128,128], index: 5, kind: input, shape index: {}]
  %s6 = inlined_call_operand.vmem [shape: f32[1,128], index: 6, kind: input, shape index: {}]
  %s7 = inlined_call_operand.vmem [shape: s32[1,128], index: 7, kind: input, shape index: {}]
  %s8 = inlined_call_operand.vmem [shape: s32[1,128], index: 8, kind: input, shape index: {}]
  %s9 = inlined_call_operand.hbm [shape: f32[2,128], index: 9, kind: output, shape index: {}]
  %s10 = sld [smem:[#allocation0]]
  $region62: #{tpu_custom_call.1} parent=0
    _
  %s12 = ssub.s32 1, %s10
  %s13 = scalar_select 0, %s12, %s10
  $region1: #{tpu_custom_call.1} parent=0
    #allocation2 [shape = 'u8[1024]{0}', space=vmem, size = 0x400, scoped, tag = 'input window, operand 0, single buffered']
    #allocation3 [shape = 's32[1]{0}', space=sflag, size = 0x4, scoped, tag = 'scoped memory for tpu_custom_call.1']
    #allocation4 [shape = 's32[1]{0}', space=sflag, size = 0x4, scoped, tag = 'scoped memory for tpu_custom_call.1']
    #allocation5 [shape = 'u8[32768]{0}', space=vmem, size = 0x8000, scoped, tag = 'input window, operand 1, single buffered']
    #allocation6 [shape = 's32[1]{0}', space=sflag, size = 0x4, scoped, tag = 'scoped memory for tpu_custom_call.1']
    #allocation7 [shape = 'u8[131072]{0}', space=vmem, size = 0x20000, scoped, tag = 'input window, operand 3, single buffered']
    #allocation8 [shape = 'u8[65536]{0}', space=vmem, size = 0x10000, scoped, tag = 'input window, operand 5, single buffered']
    #allocation9 [shape = 's32[1]{0}', space=sflag, size = 0x4, scoped, tag = 'scoped memory for tpu_custom_call.1']
    #allocation10 [shape = 'u8[1024]{0}', space=vmem, size = 0x400, scoped, tag = 'output window, operand 0, single buffered']
    %14 = vsyncpa [#allocation3], 0
    %15 = vsyncpa [#allocation6], 0
    %16 = vsyncpa [#allocation9], 0
    %17 = vsyncpa [#allocation4], 0
    // Predicated region
    $region2: #{tpu_custom_call.1} parent=1 // pred_check
      _
    $region3: #{tpu_custom_call.1} parent=1 // pred_check_branch
      %19 = sbr.rel (0) target = $region5
    $region4: #{tpu_custom_call.1} parent=1 // pred_region
      %s21 = ssub.s32 32, 32
      %22 = vsyncadd [#allocation3], %s21
      %s24 = sshll.u32 [#allocation2], 4
      %s25 = int_to_ptr.vmem [resolvable:$true] %s24
      %27 = dma.hbm_to_vmem [thread:$0]  %s0, 32, %s25, [#allocation3]
    $region5: #{tpu_custom_call.1} parent=1 // pred_fallthru
      _
    // Predicated region
    $region6: #{tpu_custom_call.1} parent=1 // pred_check
      _
    $region7: #{tpu_custom_call.1} parent=1 // pred_check_branch
      %29 = sbr.rel (0) target = $region9
    $region8: #{tpu_custom_call.1} parent=1 // pred_region
      %s31 = ssub.s32 1024, 1024
      %32 = vsyncadd [#allocation6], %s31
      %s33 = sshll.u32 [#allocation5], 4
      %s34 = int_to_ptr.vmem [resolvable:$true] %s33
      %39 = dma.hbm_to_vmem [thread:$0]  %s1, 1024, %s34, [#allocation6], 128, 128, 8
    $region9: #{tpu_custom_call.1} parent=1 // pred_fallthru
      _
    // Predicated region
    $region10: #{tpu_custom_call.1} parent=1 // pred_check
      _
    $region11: #{tpu_custom_call.1} parent=1 // pred_check_branch
      %41 = sbr.rel (0) target = $region13
    $region12: #{tpu_custom_call.1} parent=1 // pred_region
      _
    $region13: #{tpu_custom_call.1} parent=1 // pred_fallthru
      _
    // Predicated region
    $region14: #{tpu_custom_call.1} parent=1 // pred_check
      _
    $region15: #{tpu_custom_call.1} parent=1 // pred_check_branch
      %43 = sbr.rel (0) target = $region17
    $region16: #{tpu_custom_call.1} parent=1 // pred_region
      %s45 = ssub.s32 4096, 4096
      %46 = vsyncadd [#allocation6], %s45
      %s47 = sshll.u32 [#allocation7], 4
      %s48 = int_to_ptr.vmem [resolvable:$true] %s47
      %53 = dma.hbm_to_vmem [thread:$0]  %s3, 4096, %s48, [#allocation6], 128, 128, 8
    $region17: #{tpu_custom_call.1} parent=1 // pred_fallthru
      _
    // Predicated region
    $region18: #{tpu_custom_call.1} parent=1 // pred_check
      _
    $region19: #{tpu_custom_call.1} parent=1 // pred_check_branch
      %55 = sbr.rel (0) target = $region21
    $region20: #{tpu_custom_call.1} parent=1 // pred_region
      _
    $region21: #{tpu_custom_call.1} parent=1 // pred_fallthru
      _
    // Predicated region
    $region22: #{tpu_custom_call.1} parent=1 // pred_check
      _
    $region23: #{tpu_custom_call.1} parent=1 // pred_check_branch
      %57 = sbr.rel (0) target = $region25
    $region24: #{tpu_custom_call.1} parent=1 // pred_region
      %s59 = ssub.s32 2048, 2048
      %60 = vsyncadd [#allocation9], %s59
      %s61 = sshll.u32 [#allocation8], 4
      %s62 = int_to_ptr.vmem [resolvable:$true] %s61
      %67 = dma.hbm_to_vmem [thread:$0]  %s5, 2048, %s62, [#allocation9], 128, 128, 8
    $region25: #{tpu_custom_call.1} parent=1 // pred_fallthru
      _
    // Predicated region
    $region26: #{tpu_custom_call.1} parent=1 // pred_check
      _
    $region27: #{tpu_custom_call.1} parent=1 // pred_check_branch
      %69 = sbr.rel (0) target = $region29
    $region28: #{tpu_custom_call.1} parent=1 // pred_region
      _
    $region29: #{tpu_custom_call.1} parent=1 // pred_fallthru
      _
    // Predicated region
    $region30: #{tpu_custom_call.1} parent=1 // pred_check
      _
    $region31: #{tpu_custom_call.1} parent=1 // pred_check_branch
      %71 = sbr.rel (0) target = $region33
    $region32: #{tpu_custom_call.1} parent=1 // pred_region
      _
    $region33: #{tpu_custom_call.1} parent=1 // pred_fallthru
      _
    // Predicated region
    $region34: #{tpu_custom_call.1} parent=1 // pred_check
      _
    $region35: #{tpu_custom_call.1} parent=1 // pred_check_branch
      %73 = sbr.rel (0) target = $region37
    $region36: #{tpu_custom_call.1} parent=1 // pred_region
      _
    $region37: #{tpu_custom_call.1} parent=1 // pred_fallthru
      _
    // Predicated region
    $region38: #{tpu_custom_call.1} parent=1 // pred_check
      _
    $region39: #{tpu_custom_call.1} parent=1 // pred_check_branch
      %75 = sbr.rel (0) target = $region41
    $region40: #{tpu_custom_call.1} parent=1 // pred_region
      %76 = dma.done [#allocation3], 32
    $region41: #{tpu_custom_call.1} parent=1 // pred_fallthru
      _
    // Predicated region
    $region42: #{tpu_custom_call.1} parent=1 // pred_check
      _
    $region43: #{tpu_custom_call.1} parent=1 // pred_check_branch
      %78 = sbr.rel (0) target = $region45
    $region44: #{tpu_custom_call.1} parent=1 // pred_region
      %79 = dma.done [#allocation6], 1024
    $region45: #{tpu_custom_call.1} parent=1 // pred_fallthru
      _
    // Predicated region
    $region46: #{tpu_custom_call.1} parent=1 // pred_check
      _
    $region47: #{tpu_custom_call.1} parent=1 // pred_check_branch
      %81 = sbr.rel (0) target = $region49
    $region48: #{tpu_custom_call.1} parent=1 // pred_region
      %82 = dma.done [#allocation6], 4096
    $region49: #{tpu_custom_call.1} parent=1 // pred_fallthru
      _
    // Predicated region
    $region50: #{tpu_custom_call.1} parent=1 // pred_check
      _
    $region51: #{tpu_custom_call.1} parent=1 // pred_check_branch
      %84 = sbr.rel (0) target = $region53
    $region52: #{tpu_custom_call.1} parent=1 // pred_region
      %85 = dma.done [#allocation9], 2048
    $region53: #{tpu_custom_call.1} parent=1 // pred_fallthru
      _
    %v86 = vld [vmem:[#allocation2] sm:$0x3]
    %v87 = vld [vmem:[#allocation5] sm:$0xff]
    %v88 = vld [vmem:[#allocation5 + $0x8] sm:$0xff]
    %v89 = vld [vmem:[#allocation5 + $0x10] sm:$0xff]
    %v90 = vld [vmem:[#allocation5 + $0x18] sm:$0xff]
    %v91 = vld [vmem:[#allocation5 + $0x20] sm:$0xff]
    %v92 = vld [vmem:[#allocation5 + $0x28] sm:$0xff]
    %v93 = vld [vmem:[#allocation5 + $0x30] sm:$0xff]
    %v94 = vld [vmem:[#allocation5 + $0x38] sm:$0xff]
    %v95 = vld [vmem:[%s2] sm:$0x1]
    %v97 = vlaneseq
    %v98 = vshrl.u32 %v97, 7
    %v99 = vsub.s32 0, %v98
    %v100 = vrot.slane %v95, %v99
    %vm102 = vcmask 523264
    %v104 = vsel %vm102, %v86, 0
    %106 = vmatprep.subr.mxu0 0.0
    %107 = vmatpush1.msra.mxu0 %v87
    %108 = vmatprep.subr.mxu0 0.0
    %109 = vmatpush1.msra.mxu0 %v88
    %110 = vmatprep.subr.mxu0 0.0
    %111 = vmatpush1.msra.mxu0 %v89
    %112 = vmatprep.subr.mxu0 0.0
    %113 = vmatpush1.msra.mxu0 %v90
    %114 = vmatprep.subr.mxu0 0.0
    %115 = vmatpush1.msra.mxu0 %v91
    %116 = vmatprep.subr.mxu0 0.0
    %117 = vmatpush1.msra.mxu0 %v92
    %118 = vmatprep.subr.mxu0 0.0
    %119 = vmatpush1.msra.mxu0 %v93
    %120 = vmatprep.subr.mxu0 0.0
    %121 = vmatpush1.msra.mxu0 %v94
    %122 = vmatprep.subr.mxu0 0.0
    %123 = vmatpush1.msra.mxu0 0.0
    %124 = vmatprep.subr.mxu0 0.0
    %125 = vmatpush1.msra.mxu0 0.0
    %126 = vmatprep.subr.mxu0 0.0
    %127 = vmatpush1.msra.mxu0 0.0
    %128 = vmatprep.subr.mxu0 0.0
    %129 = vmatpush1.msra.mxu0 0.0
    %130 = vmatprep.subr.mxu0 0.0
    %131 = vmatpush1.msra.mxu0 0.0
    %132 = vmatprep.subr.mxu0 0.0
    %133 = vmatpush1.msra.mxu0 0.0
    %134 = vmatprep.subr.mxu0 0.0
    %135 = vmatpush1.msra.mxu0 0.0
    %136 = vmatprep.subr.mxu0 0.0
    %137 = vmatpush1.msra.mxu0 0.0
    %138 = vmatprep.subr.mxu0 0.0
    %139 = vmatpush1.msra.mxu0 0.0
    %140 = vmatprep.subr.mxu0 0.0
    %141 = vmatpush1.msra.mxu0 0.0
    %142 = vmatprep.subr.mxu0 0.0
    %143 = vmatpush1.msra.mxu0 0.0
    %144 = vmatprep.subr.mxu0 0.0
    %145 = vmatpush1.msra.mxu0 0.0
    %146 = vmatprep.subr.mxu0 0.0
    %147 = vmatpush1.msra.mxu0 0.0
    %148 = vmatprep.subr.mxu0 0.0
    %149 = vmatpush1.msra.mxu0 0.0
    %150 = vmatprep.subr.mxu0 0.0
    %151 = vmatpush1.msra.mxu0 0.0
    %152 = vmatprep.subr.mxu0 0.0
    %153 = vmatpush1.msra.mxu0 0.0
    %154 = vmatprep.subr.mxu0 0.0
    %155 = vmatpush1.msra.mxu0 0.0
    %156 = vmatprep.subr.mxu0 0.0
    %157 = vmatpush1.msra.mxu0 0.0
    %158 = vmatprep.subr.mxu0 0.0
    %159 = vmatpush1.msra.mxu0 0.0
    %160 = vmatprep.subr.mxu0 0.0
    %161 = vmatpush1.msra.mxu0 0.0
    %162 = vmatprep.subr.mxu0 0.0
    %163 = vmatpush1.msra.mxu0 0.0
    %164 = vmatprep.subr.mxu0 0.0
    %165 = vmatpush1.msra.mxu0 0.0
    %166 = vmatprep.subr.mxu0 0.0
    %167 = vmatpush1.msra.mxu0 0.0
    %168 = vmatprep.subr.mxu0 0.0
    %169 = vmatpush1.msra.mxu0 0.0
    %170 = vmatprep.mubr.f32.mxu0 0.0
    %171 = vmatmul.mubr.f32.gmra.mrb[0].mxu0 %v104
    %v172 = vpop.f32.mrb[0].mxu0
    %v173 = vadd.f32 %v100, %v172
    %v174 = vpop.f32.mrb[0].mxu0
    %175 = vdwg.mxu0
    %v176 = vtanh.pop %v173
    %v177 = vld [vmem:[#allocation7] sm:$0xff]
    %v178 = vld [vmem:[#allocation7 + $0x8] sm:$0xff]
    %v179 = vld [vmem:[#allocation7 + $0x10] sm:$0xff]
    %v180 = vld [vmem:[#allocation7 + $0x18] sm:$0xff]
    %v181 = vld [vmem:[#allocation7 + $0x20] sm:$0xff]
    %v182 = vld [vmem:[#allocation7 + $0x28] sm:$0xff]
    %v183 = vld [vmem:[#allocation7 + $0x30] sm:$0xff]
    %v184 = vld [vmem:[#allocation7 + $0x38] sm:$0xff]
    %v185 = vld [vmem:[#allocation7 + $0x40] sm:$0xff]
    %v186 = vld [vmem:[#allocation7 + $0x48] sm:$0xff]
    %v187 = vld [vmem:[#allocation7 + $0x50] sm:$0xff]
    %v188 = vld [vmem:[#allocation7 + $0x58] sm:$0xff]
    %v189 = vld [vmem:[#allocation7 + $0x60] sm:$0xff]
    %v190 = vld [vmem:[#allocation7 + $0x68] sm:$0xff]
    %v191 = vld [vmem:[#allocation7 + $0x70] sm:$0xff]
    %v192 = vld [vmem:[#allocation7 + $0x78] sm:$0xff]
    %193 = vmatprep.subr.mxu0 0.0
    %194 = vmatpush1.msra.mxu0 %v177
    %195 = vmatprep.subr.mxu0 0.0
    %196 = vmatpush1.msra.mxu0 %v178
    %197 = vmatprep.subr.mxu0 0.0
    %198 = vmatpush1.msra.mxu0 %v179
    %199 = vmatprep.subr.mxu0 0.0
    %200 = vmatpush1.msra.mxu0 %v180
    %201 = vmatprep.subr.mxu0 0.0
    %202 = vmatpush1.msra.mxu0 %v181
    %203 = vmatprep.subr.mxu0 0.0
    %204 = vmatpush1.msra.mxu0 %v182
    %205 = vmatprep.subr.mxu0 0.0
    %206 = vmatpush1.msra.mxu0 %v183
    %207 = vmatprep.subr.mxu0 0.0
    %208 = vmatpush1.msra.mxu0 %v184
    %209 = vmatprep.subr.mxu0 0.0
    %210 = vmatpush1.msra.mxu0 %v185
    %211 = vmatprep.subr.mxu0 0.0
    %212 = vmatpush1.msra.mxu0 %v186
    %213 = vmatprep.subr.mxu0 0.0
    %214 = vmatpush1.msra.mxu0 %v187
    %215 = vmatprep.subr.mxu0 0.0
    %216 = vmatpush1.msra.mxu0 %v188
    %217 = vmatprep.subr.mxu0 0.0
    %218 = vmatpush1.msra.mxu0 %v189
    %219 = vmatprep.subr.mxu0 0.0
    %220 = vmatpush1.msra.mxu0 %v190
    %221 = vmatprep.subr.mxu0 0.0
    %222 = vmatpush1.msra.mxu0 %v191
    %223 = vmatprep.subr.mxu0 0.0
    %224 = vmatpush1.msra.mxu0 %v192
    %225 = vmatprep.subr.mxu0 0.0
    %226 = vmatpush1.msra.mxu0 0.0
    %227 = vmatprep.subr.mxu0 0.0
    %228 = vmatpush1.msra.mxu0 0.0
    %229 = vmatprep.subr.mxu0 0.0
    %230 = vmatpush1.msra.mxu0 0.0
    %231 = vmatprep.subr.mxu0 0.0
    %232 = vmatpush1.msra.mxu0 0.0
    %233 = vmatprep.subr.mxu0 0.0
    %234 = vmatpush1.msra.mxu0 0.0
    %235 = vmatprep.subr.mxu0 0.0
    %236 = vmatpush1.msra.mxu0 0.0
    %237 = vmatprep.subr.mxu0 0.0
    %238 = vmatpush1.msra.mxu0 0.0
    %239 = vmatprep.subr.mxu0 0.0
    %240 = vmatpush1.msra.mxu0 0.0
    %241 = vmatprep.subr.mxu0 0.0
    %242 = vmatpush1.msra.mxu0 0.0
    %243 = vmatprep.subr.mxu0 0.0
    %244 = vmatpush1.msra.mxu0 0.0
    %245 = vmatprep.subr.mxu0 0.0
    %246 = vmatpush1.msra.mxu0 0.0
    %247 = vmatprep.subr.mxu0 0.0
    %248 = vmatpush1.msra.mxu0 0.0
    %249 = vmatprep.subr.mxu0 0.0
    %250 = vmatpush1.msra.mxu0 0.0
    %251 = vmatprep.subr.mxu0 0.0
    %252 = vmatpush1.msra.mxu0 0.0
    %253 = vmatprep.subr.mxu0 0.0
    %254 = vmatpush1.msra.mxu0 0.0
    %255 = vmatprep.subr.mxu0 0.0
    %256 = vmatpush1.msra.mxu0 0.0
    %257 = vmatprep.mubr.f32.mxu0 0.0
    %258 = vmatmul.mubr.f32.gmra.mrb[0].mxu0 %v176
    %v259 = vpop.f32.mrb[0].mxu0
    %v260 = vadd.f32 0.0, %v259
    %v261 = vpop.f32.mrb[0].mxu0
    %262 = vdwg.mxu0
    %v263 = vadd.f32 %v176, %v260
    %v264 = vld [vmem:[%s4] sm:$0x1]
    %v266 = vlaneseq
    %v267 = vshrl.u32 %v266, 7
    %v268 = vsub.s32 0, %v267
    %v269 = vrot.slane %v264, %v268
    %v271 = vadd.f32 %v263, %v269
    %v272 = vtanh.pop %v271
    %s273 = scalar_lea.vmem [#allocation7], 128
    %v274 = vld [vmem:[%s273] sm:$0xff]
    %v275 = vld [vmem:[%s273 + $0x8] sm:$0xff]
    %v276 = vld [vmem:[%s273 + $0x10] sm:$0xff]
    %v277 = vld [vmem:[%s273 + $0x18] sm:$0xff]
    %v278 = vld [vmem:[%s273 + $0x20] sm:$0xff]
    %v279 = vld [vmem:[%s273 + $0x28] sm:$0xff]
    %v280 = vld [vmem:[%s273 + $0x30] sm:$0xff]
    %v281 = vld [vmem:[%s273 + $0x38] sm:$0xff]
    %v282 = vld [vmem:[%s273 + $0x40] sm:$0xff]
    %v283 = vld [vmem:[%s273 + $0x48] sm:$0xff]
    %v284 = vld [vmem:[%s273 + $0x50] sm:$0xff]
    %v285 = vld [vmem:[%s273 + $0x58] sm:$0xff]
    %v286 = vld [vmem:[%s273 + $0x60] sm:$0xff]
    %v287 = vld [vmem:[%s273 + $0x68] sm:$0xff]
    %v288 = vld [vmem:[%s273 + $0x70] sm:$0xff]
    %v289 = vld [vmem:[%s273 + $0x78] sm:$0xff]
    %290 = vmatprep.subr.mxu0 0.0
    %291 = vmatpush1.msra.mxu0 %v274
    %292 = vmatprep.subr.mxu0 0.0
    %293 = vmatpush1.msra.mxu0 %v275
    %294 = vmatprep.subr.mxu0 0.0
    %295 = vmatpush1.msra.mxu0 %v276
    %296 = vmatprep.subr.mxu0 0.0
    %297 = vmatpush1.msra.mxu0 %v277
    %298 = vmatprep.subr.mxu0 0.0
    %299 = vmatpush1.msra.mxu0 %v278
    %300 = vmatprep.subr.mxu0 0.0
    %301 = vmatpush1.msra.mxu0 %v279
    %302 = vmatprep.subr.mxu0 0.0
    %303 = vmatpush1.msra.mxu0 %v280
    %304 = vmatprep.subr.mxu0 0.0
    %305 = vmatpush1.msra.mxu0 %v281
    %306 = vmatprep.subr.mxu0 0.0
    %307 = vmatpush1.msra.mxu0 %v282
    %308 = vmatprep.subr.mxu0 0.0
    %309 = vmatpush1.msra.mxu0 %v283
    %310 = vmatprep.subr.mxu0 0.0
    %311 = vmatpush1.msra.mxu0 %v284
    %312 = vmatprep.subr.mxu0 0.0
    %313 = vmatpush1.msra.mxu0 %v285
    %314 = vmatprep.subr.mxu0 0.0
    %315 = vmatpush1.msra.mxu0 %v286
    %316 = vmatprep.subr.mxu0 0.0
    %317 = vmatpush1.msra.mxu0 %v287
    %318 = vmatprep.subr.mxu0 0.0
    %319 = vmatpush1.msra.mxu0 %v288
    %320 = vmatprep.subr.mxu0 0.0
    %321 = vmatpush1.msra.mxu0 %v289
    %322 = vmatprep.subr.mxu0 0.0
    %323 = vmatpush1.msra.mxu0 0.0
    %324 = vmatprep.subr.mxu0 0.0
    %325 = vmatpush1.msra.mxu0 0.0
    %326 = vmatprep.subr.mxu0 0.0
    %327 = vmatpush1.msra.mxu0 0.0
    %328 = vmatprep.subr.mxu0 0.0
    %329 = vmatpush1.msra.mxu0 0.0
    %330 = vmatprep.subr.mxu0 0.0
    %331 = vmatpush1.msra.mxu0 0.0
    %332 = vmatprep.subr.mxu0 0.0
    %333 = vmatpush1.msra.mxu0 0.0
    %334 = vmatprep.subr.mxu0 0.0
    %335 = vmatpush1.msra.mxu0 0.0
    %336 = vmatprep.subr.mxu0 0.0
    %337 = vmatpush1.msra.mxu0 0.0
    %338 = vmatprep.subr.mxu0 0.0
    %339 = vmatpush1.msra.mxu0 0.0
    %340 = vmatprep.subr.mxu0 0.0
    %341 = vmatpush1.msra.mxu0 0.0
    %342 = vmatprep.subr.mxu0 0.0
    %343 = vmatpush1.msra.mxu0 0.0
    %344 = vmatprep.subr.mxu0 0.0
    %345 = vmatpush1.msra.mxu0 0.0
    %346 = vmatprep.subr.mxu0 0.0
    %347 = vmatpush1.msra.mxu0 0.0
    %348 = vmatprep.subr.mxu0 0.0
    %349 = vmatpush1.msra.mxu0 0.0
    %350 = vmatprep.subr.mxu0 0.0
    %351 = vmatpush1.msra.mxu0 0.0
    %352 = vmatprep.subr.mxu0 0.0
    %353 = vmatpush1.msra.mxu0 0.0
    %354 = vmatprep.mubr.f32.mxu0 0.0
    %355 = vmatmul.mubr.f32.gmra.mrb[0].mxu0 %v272
    %v356 = vpop.f32.mrb[0].mxu0
    %v357 = vadd.f32 0.0, %v356
    %v358 = vpop.f32.mrb[0].mxu0
    %359 = vdwg.mxu0
    %v360 = vadd.f32 %v176, %v357
    %s361 = scalar_lea.vmem %s4, 1
    %v362 = vld [vmem:[%s361] sm:$0x1]
    %v364 = vlaneseq
    %v365 = vshrl.u32 %v364, 7
    %v366 = vsub.s32 0, %v365
    %v367 = vrot.slane %v362, %v366
    %v369 = vadd.f32 %v360, %v367
    %v370 = vtanh.pop %v369
    %v371 = vld [vmem:[#allocation8] sm:$0xff]
    %v372 = vld [vmem:[#allocation8 + $0x8] sm:$0xff]
    %v373 = vld [vmem:[#allocation8 + $0x10] sm:$0xff]
    %v374 = vld [vmem:[#allocation8 + $0x18] sm:$0xff]
    %v375 = vld [vmem:[#allocation8 + $0x20] sm:$0xff]
    %v376 = vld [vmem:[#allocation8 + $0x28] sm:$0xff]
    %v377 = vld [vmem:[#allocation8 + $0x30] sm:$0xff]
    %v378 = vld [vmem:[#allocation8 + $0x38] sm:$0xff]
    %v379 = vld [vmem:[#allocation8 + $0x40] sm:$0xff]
    %v380 = vld [vmem:[#allocation8 + $0x48] sm:$0xff]
    %v381 = vld [vmem:[#allocation8 + $0x50] sm:$0xff]
    %v382 = vld [vmem:[#allocation8 + $0x58] sm:$0xff]
    %v383 = vld [vmem:[#allocation8 + $0x60] sm:$0xff]
    %v384 = vld [vmem:[#allocation8 + $0x68] sm:$0xff]
    %v385 = vld [vmem:[#allocation8 + $0x70] sm:$0xff]
    %v386 = vld [vmem:[#allocation8 + $0x78] sm:$0xff]
    %v387 = vld [vmem:[%s6] sm:$0x1]
    %v389 = vlaneseq
    %v390 = vshrl.u32 %v389, 7
    %v391 = vsub.s32 0, %v390
    %v392 = vrot.slane %v387, %v391
    %394 = vmatprep.subr.mxu0 0.0
    %395 = vmatpush1.msra.mxu0 %v371
    %396 = vmatprep.subr.mxu0 0.0
    %397 = vmatpush1.msra.mxu0 %v372
    %398 = vmatprep.subr.mxu0 0.0
    %399 = vmatpush1.msra.mxu0 %v373
    %400 = vmatprep.subr.mxu0 0.0
    %401 = vmatpush1.msra.mxu0 %v374
    %402 = vmatprep.subr.mxu0 0.0
    %403 = vmatpush1.msra.mxu0 %v375
    %404 = vmatprep.subr.mxu0 0.0
    %405 = vmatpush1.msra.mxu0 %v376
    %406 = vmatprep.subr.mxu0 0.0
    %407 = vmatpush1.msra.mxu0 %v377
    %408 = vmatprep.subr.mxu0 0.0
    %409 = vmatpush1.msra.mxu0 %v378
    %410 = vmatprep.subr.mxu0 0.0
    %411 = vmatpush1.msra.mxu0 %v379
    %412 = vmatprep.subr.mxu0 0.0
    %413 = vmatpush1.msra.mxu0 %v380
    %414 = vmatprep.subr.mxu0 0.0
    %415 = vmatpush1.msra.mxu0 %v381
    %416 = vmatprep.subr.mxu0 0.0
    %417 = vmatpush1.msra.mxu0 %v382
    %418 = vmatprep.subr.mxu0 0.0
    %419 = vmatpush1.msra.mxu0 %v383
    %420 = vmatprep.subr.mxu0 0.0
    %421 = vmatpush1.msra.mxu0 %v384
    %422 = vmatprep.subr.mxu0 0.0
    %423 = vmatpush1.msra.mxu0 %v385
    %424 = vmatprep.subr.mxu0 0.0
    %425 = vmatpush1.msra.mxu0 %v386
    %426 = vmatprep.subr.mxu0 0.0
    %427 = vmatpush1.msra.mxu0 0.0
    %428 = vmatprep.subr.mxu0 0.0
    %429 = vmatpush1.msra.mxu0 0.0
    %430 = vmatprep.subr.mxu0 0.0
    %431 = vmatpush1.msra.mxu0 0.0
    %432 = vmatprep.subr.mxu0 0.0
    %433 = vmatpush1.msra.mxu0 0.0
    %434 = vmatprep.subr.mxu0 0.0
    %435 = vmatpush1.msra.mxu0 0.0
    %436 = vmatprep.subr.mxu0 0.0
    %437 = vmatpush1.msra.mxu0 0.0
    %438 = vmatprep.subr.mxu0 0.0
    %439 = vmatpush1.msra.mxu0 0.0
    %440 = vmatprep.subr.mxu0 0.0
    %441 = vmatpush1.msra.mxu0 0.0
    %442 = vmatprep.subr.mxu0 0.0
    %443 = vmatpush1.msra.mxu0 0.0
    %444 = vmatprep.subr.mxu0 0.0
    %445 = vmatpush1.msra.mxu0 0.0
    %446 = vmatprep.subr.mxu0 0.0
    %447 = vmatpush1.msra.mxu0 0.0
    %448 = vmatprep.subr.mxu0 0.0
    %449 = vmatpush1.msra.mxu0 0.0
    %450 = vmatprep.subr.mxu0 0.0
    %451 = vmatpush1.msra.mxu0 0.0
    %452 = vmatprep.subr.mxu0 0.0
    %453 = vmatpush1.msra.mxu0 0.0
    %454 = vmatprep.subr.mxu0 0.0
    %455 = vmatpush1.msra.mxu0 0.0
    %456 = vmatprep.subr.mxu0 0.0
    %457 = vmatpush1.msra.mxu0 0.0
    %458 = vmatprep.mubr.f32.mxu0 0.0
    %459 = vmatmul.mubr.f32.gmra.mrb[0].mxu0 %v370
    %v460 = vpop.f32.mrb[0].mxu0
    %v461 = vadd.f32 %v392, %v460
    %v462 = vpop.f32.mrb[0].mxu0
    %463 = vdwg.mxu0
    %v464 = vld [vmem:[%s7] sm:$0x1]
    %v465 = vld [vmem:[%s8] sm:$0x1]
    %vm466 = vcmp.lt.s32.totalorder %v464, 8
    %v467 = vsel %vm466, 1, 0
    %v468 = vlaneseq
    %v469 = vshrl.u32 %v468, 7
    %v470 = vsub.s32 0, %v469
    %v471 = vrot.slane %v467, %v470
    %vm472 = vcmp.eq.s32.totalorder %v471, 1
    %v473 = vsel %vm472, %v461, -1e+30
    %vm474 = vcmp.eq.s32.totalorder %v465, 0
    %v475 = vsel %vm474, 1, 0
    %v476 = vlaneseq
    %v477 = vshrl.u32 %v476, 7
    %v478 = vsub.s32 0, %v477
    %v479 = vrot.slane %v475, %v478
    %vm480 = vcmp.eq.s32.totalorder %v479, 1
    %v481 = vsel %vm480, %v473, -1e+30
    %vm482 = vcmask 1041408
    %v483 = vsel %vm482, %v481, -inf
    %484 = vmax.xlane.f32.xlu0 %v483
    %v485 = vpop.xlane.xlu0 %484
    %v486 = vsel %vm480, %v485, -1e+30
    %vm487 = vcmp.eq.s32.totalorder %v465, 1
    %v488 = vsel %vm487, 1, 0
    %v489 = vlaneseq
    %v490 = vshrl.u32 %v489, 7
    %v491 = vsub.s32 0, %v490
    %v492 = vrot.slane %v488, %v491
    %vm493 = vcmp.eq.s32.totalorder %v492, 1
    %v494 = vsel %vm493, %v473, -1e+30
    %v495 = vsel %vm482, %v494, -inf
    %496 = vmax.xlane.f32.xlu0 %v495
    %v497 = vpop.xlane.xlu0 %496
    %v498 = vsel %vm493, %v497, %v486
    %vm499 = vcmp.eq.s32.totalorder %v465, 2
    %v500 = vsel %vm499, 1, 0
    %v501 = vlaneseq
    %v502 = vshrl.u32 %v501, 7
    %v503 = vsub.s32 0, %v502
    %v504 = vrot.slane %v500, %v503
    %vm505 = vcmp.eq.s32.totalorder %v504, 1
    %v506 = vsel %vm505, %v473, -1e+30
    %v507 = vsel %vm482, %v506, -inf
    %508 = vmax.xlane.f32.xlu0 %v507
    %v509 = vpop.xlane.xlu0 %508
    %v510 = vsel %vm505, %v509, %v498
    %vm511 = vcmp.eq.s32.totalorder %v465, 3
    %v512 = vsel %vm511, 1, 0
    %v513 = vlaneseq
    %v514 = vshrl.u32 %v513, 7
    %v515 = vsub.s32 0, %v514
    %v516 = vrot.slane %v512, %v515
    %vm517 = vcmp.eq.s32.totalorder %v516, 1
    %v518 = vsel %vm517, %v473, -1e+30
    %v519 = vsel %vm482, %v518, -inf
    %520 = vmax.xlane.f32.xlu0 %v519
    %v521 = vpop.xlane.xlu0 %520
    %v522 = vsel %vm517, %v521, %v510
    %v523 = vsub.f32 %v473, %v522
    %v524 = vmul.f32 %v523, 1.442695
    %v525 = vpow.pop %v524
    %v526 = vsel %vm480, %v525, 0.0
    %v527 = vsel %vm482, %v526, 0.0
    %528 = vadd.xlane.f32.xlu0 %v527
    %v529 = vpop.xlane.xlu0 %528
    %v530 = vsel %vm480, %v529, 0.0
    %v531 = vsel %vm493, %v525, 0.0
    %v532 = vsel %vm482, %v531, 0.0
    %533 = vadd.xlane.f32.xlu0 %v532
    %v534 = vpop.xlane.xlu0 %533
    %v535 = vsel %vm493, %v534, %v530
    %v536 = vsel %vm505, %v525, 0.0
    %v537 = vsel %vm482, %v536, 0.0
    %538 = vadd.xlane.f32.xlu0 %v537
    %v539 = vpop.xlane.xlu0 %538
    %v540 = vsel %vm505, %v539, %v535
    %v541 = vsel %vm517, %v525, 0.0
    %v542 = vsel %vm482, %v541, 0.0
    %543 = vadd.xlane.f32.xlu0 %v542
    %v544 = vpop.xlane.xlu0 %543
    %v545 = vsel %vm517, %v544, %v540
    %v546 = vrcp.pop %v545
    %v547 = vmul.f32 %v545, %v546
    %v548 = vsub.f32 2.0, %v547
    %v549 = vmul.f32 %v546, %v548
    %v550 = vmul.f32 %v525, %v549
    %vm551 = vcmp.eq.s32.totalorder %v464, 8
    %v552 = vsel %vm551, 1, 0
    %v553 = vlaneseq
    %v554 = vshrl.u32 %v553, 7
    %v555 = vsub.s32 0, %v554
    %v556 = vrot.slane %v552, %v555
    %vm557 = vcmp.eq.s32.totalorder %v556, 1
    %v558 = vsel %vm557, %v461, %v550
    %559 = vst [vmem:[#allocation10] sm:$0x3] %v558
    // Predicated region
    $region54: #{tpu_custom_call.1} parent=1 // pred_check
      _
    $region55: #{tpu_custom_call.1} parent=1 // pred_check_branch
      %561 = sbr.rel (0) target = $region57
    $region56: #{tpu_custom_call.1} parent=1 // pred_region
      %s563 = ssub.s32 32, 32
      %564 = vsyncadd [#allocation4], %s563
      %s566 = sshll.u32 [#allocation10], 4
      %s567 = int_to_ptr.vmem [resolvable:$true] %s566
      %569 = dma.vmem_to_hbm [thread:$0]  %s567, 32, %s9, [#allocation4]
    $region57: #{tpu_custom_call.1} parent=1 // pred_fallthru
      _
    // Predicated region
    $region58: #{tpu_custom_call.1} parent=1 // pred_check
      _
    $region59: #{tpu_custom_call.1} parent=1 // pred_check_branch
      %571 = sbr.rel (0) target = $region61
    $region60: #{tpu_custom_call.1} parent=1 // pred_region
      %572 = dma.done [#allocation4], 32
    $region61: #{tpu_custom_call.1} parent=1 // pred_fallthru
      _
    %573 = vsyncpa [#allocation3], 1
    %574 = vsyncpa [#allocation6], 1
    %575 = vsyncpa [#allocation9], 1
    %576 = vsyncpa [#allocation4], 1

</llo_original>
